<compile_context>
chip_gen: v6e
topology: v6e:2x2x1
jax: 0.10.0
libtpu: 0.0.40
codegen_flags: <defaults>
</compile_context>

<pallas_src>
import functools

import jax
import jax.numpy as jnp
from jax.experimental import pallas as pl
from jax.experimental.pallas import tpu as pltpu

_LANES = 128


def _round_up(x, m):
    return ((x + m - 1) // m) * m


def _frame_clip_loss_kernel(
    fp_ref, ft_ref, cp_ref, ct_ref, out_ref, acc_ref,
    *, clip_ratio, n_frame, n_clip, tile_r, nj,
):
    p = pl.program_id(0)   # parallel split (v7x: one per TensorCore)
    j = pl.program_id(1)   # row-tile reduction axis

    @pl.when(j == 0)
    def _init():
        acc_ref[0] = 0.0

    # ---- frame BCEWithLogits partial sum for this tile (masked vs padding) ----
    x = fp_ref[...].astype(jnp.float32)
    y = ft_ref[...].astype(jnp.float32)
    # Numerically stable BCE-with-logits (matches torch.nn.BCEWithLogitsLoss):
    #   max(x, 0) - x*y + log(1 + exp(-|x|))
    elem = jnp.maximum(x, 0.0) - x * y + jnp.log1p(jnp.exp(-jnp.abs(x)))

    # Mask out zero-padded tail elements using the global flat index.
    # (int32 indexing is fine up to ~2^31 frame elements.)
    base = (p * nj + j) * (tile_r * _LANES)
    ridx = jax.lax.broadcasted_iota(jnp.int32, (tile_r, _LANES), 0)
    lidx = jax.lax.broadcasted_iota(jnp.int32, (tile_r, _LANES), 1)
    gidx = base + ridx * _LANES + lidx
    elem = jnp.where(gidx < n_frame, elem, 0.0)

    acc_ref[0] += jnp.sum(elem)

    # ---- finalize: divide by true count, combine with the (tiny) clip loss ----
    @pl.when(j == nj - 1)
    def _finalize():
        frame_term = acc_ref[0] * ((1.0 - clip_ratio) / n_frame)

        cx = cp_ref[...].astype(jnp.float32)
        cy = ct_ref[...].astype(jnp.float32)
        celem = jnp.maximum(cx, 0.0) - cx * cy + jnp.log1p(jnp.exp(-jnp.abs(cx)))
        clip_term = (clip_ratio / n_clip) * jnp.sum(celem)

        total = frame_term + jnp.where(p == 0, clip_term, 0.0)
        out_ref[...] = jnp.full((1, 1, _LANES), total, dtype=jnp.float32)


def frame_clip_loss(
    frame_preds, frame_true, clip_preds, clip_true,
    clip_ratio=0.5, *, max_tile_rows=2048, num_parallel=2,
):
    """Pallas implementation of FrameClipLoss.forward (reduction='mean')."""
    B, T, C = frame_preds.shape
    Bc, Cc = clip_preds.shape
    n_frame = B * T * C
    n_clip = Bc * Cc

    # --- choose tiling: (P parallel splits) x (nj row tiles of tile_r x 128) ---
    P = num_parallel
    rows_needed = pl.cdiv(n_frame, _LANES)
    per_split = pl.cdiv(rows_needed, P)
    tile_r = min(max_tile_rows, _round_up(per_split, 8))
    nj = pl.cdiv(per_split, tile_r)
    rows_padded = P * nj * tile_r
    pad = rows_padded * _LANES - n_frame

    def to_lane_dense(a):
        flat = a.reshape(-1)
        flat = jnp.pad(flat, (0, pad))
        return flat.reshape(rows_padded, _LANES)

    fp = to_lane_dense(frame_preds)
    ft = to_lane_dense(frame_true)

    kernel = functools.partial(
        _frame_clip_loss_kernel,
        clip_ratio=float(clip_ratio),
        n_frame=n_frame, n_clip=n_clip,
        tile_r=tile_r, nj=nj,
    )

    # VMEM budget: 2 frame inputs x 2 pipeline buffers x tile, plus slack.
    tile_bytes = tile_r * _LANES * fp.dtype.itemsize
    vmem_limit = int(min(100 * 1024 * 1024,
                         max(8 * 1024 * 1024, 2 * 2 * tile_bytes + 2 * 1024 * 1024)))

    cost = pl.CostEstimate(
        flops=5 * (n_frame + n_clip),
        transcendentals=2 * (n_frame + n_clip),
        bytes_accessed=(2 * n_frame * frame_preds.dtype.itemsize
                        + 2 * n_clip * clip_preds.dtype.itemsize
                        + P * _LANES * 4),
    )

    out = pl.pallas_call(
        kernel,
        out_shape=jax.ShapeDtypeStruct((P, 1, _LANES), jnp.float32),
        grid_spec=pltpu.PrefetchScalarGridSpec(
            num_scalar_prefetch=0,
            grid=(P, nj),
            in_specs=[
                pl.BlockSpec((tile_r, _LANES), lambda p, j: (p * nj + j, 0)),  # frame preds
                pl.BlockSpec((tile_r, _LANES), lambda p, j: (p * nj + j, 0)),  # frame true
                pl.BlockSpec((Bc, Cc), lambda p, j: (0, 0)),                   # clip preds (resident)
                pl.BlockSpec((Bc, Cc), lambda p, j: (0, 0)),                   # clip true  (resident)
            ],
            out_specs=pl.BlockSpec((1, 1, _LANES), lambda p, j: (p, 0, 0)),
            scratch_shapes=[pltpu.SMEM((1,), jnp.float32)],
        ),
        compiler_params=pltpu.CompilerParams(
            dimension_semantics=("parallel", "arbitrary"),
            vmem_limit_bytes=vmem_limit,
        ),
        cost_estimate=cost,
    )(fp, ft, clip_preds, clip_true)

    # Combine the per-split partials (clip term was added only on split 0).
    return jnp.sum(out[:, 0, 0])


def _reference_loss(frame_preds, frame_true, clip_preds, clip_true, clip_ratio=0.5):
    def bce(x, y):
        x = x.astype(jnp.float32)
        y = y.astype(jnp.float32)
        return jnp.mean(jnp.maximum(x, 0.0) - x * y + jnp.log1p(jnp.exp(-jnp.abs(x))))

    return bce(clip_preds, clip_true) * clip_ratio + bce(frame_preds, frame_true) * (
        1.0 - clip_ratio
    )


if __name__ == "__main__":
    key = jax.random.PRNGKey(0)

    # --- Test 1: small shapes matching the module's forward signature ---------
    B, T, n_class = 2, 8, 10
    k1, k2, k3, k4, key = jax.random.split(key, 5)
    frame_preds = jax.random.normal(k1, (B, T, n_class), dtype=jnp.float32)
    frame_true = jax.random.bernoulli(k2, 0.3, (B, T, n_class)).astype(jnp.float32)
    clip_preds = jax.random.normal(k3, (B, n_class), dtype=jnp.float32)
    clip_true = jax.random.bernoulli(k4, 0.3, (B, n_class)).astype(jnp.float32)

    loss = frame_clip_loss(frame_preds, frame_true, clip_preds, clip_true, clip_ratio=0.5)
    loss = jax.block_until_ready(loss)
    ref = _reference_loss(frame_preds, frame_true, clip_preds, clip_true, clip_ratio=0.5)
    assert jnp.allclose(loss, ref, atol=1e-5, rtol=1e-5), (loss, ref)

    # --- Test 2: force multi-tile grid (nj > 1) + both parallel splits --------
    B2, T2, C2 = 3, 50, 21
    k1, k2, k3, k4, key = jax.random.split(key, 5)
    fp2 = jax.random.normal(k1, (B2, T2, C2), dtype=jnp.float32)
    ft2 = jax.random.bernoulli(k2, 0.3, (B2, T2, C2)).astype(jnp.float32)
    cp2 = jax.random.normal(k3, (B2, C2), dtype=jnp.float32)
    ct2 = jax.random.bernoulli(k4, 0.3, (B2, C2)).astype(jnp.float32)

    loss2 = frame_clip_loss(fp2, ft2, cp2, ct2, clip_ratio=0.3, max_tile_rows=8)
    loss2 = jax.block_until_ready(loss2)
    ref2 = _reference_loss(fp2, ft2, cp2, ct2, clip_ratio=0.3)
    assert jnp.allclose(loss2, ref2, atol=1e-5, rtol=1e-5), (loss2, ref2)

    print("KERNEL_OK")
</pallas_src>

<mosaic_0001>
module attributes {stable_mosaic.version = 11 : i64} {
  func.func @_frame_clip_loss_kernel(%arg0: i32, %arg1: i32, %arg2: memref<8x128xf32, #tpu.memory_space<vmem>>, %arg3: memref<8x128xf32, #tpu.memory_space<vmem>>, %arg4: memref<2x10xf32, #tpu.memory_space<vmem>>, %arg5: memref<2x10xf32, #tpu.memory_space<vmem>>, %arg6: memref<1x1x128xf32, #tpu.memory_space<vmem>>, %arg7: memref<1xf32, #tpu.memory_space<smem>>) attributes {dimension_semantics = [#tpu.dimension_semantics<parallel>, #tpu.dimension_semantics<arbitrary>], iteration_bounds = array<i64: 2, 1>, scalar_prefetch = 0 : i64, scratch_operands = 1 : i64, tpu.core_type = #tpu.core_type<tc>, window_params = [{transform_indices = @transform_0, window_bounds = array<i64: 8, 128>}, {transform_indices = @transform_1, window_bounds = array<i64: 8, 128>}, {pipeline_mode = #tpu.pipeline_mode<synchronous>, transform_indices = @transform_2, window_bounds = array<i64: 2, 10>}, {pipeline_mode = #tpu.pipeline_mode<synchronous>, transform_indices = @transform_3, window_bounds = array<i64: 2, 10>}, {transform_indices = @transform_4, window_bounds = array<i64: 1, 1, 128>}]} {
    %c0_i32 = arith.constant 0 : i32
    %0 = arith.cmpi eq, %arg1, %c0_i32 : i32
    %1 = arith.extui %0 : i1 to i32
    %c0_i32_0 = arith.constant 0 : i32
    %2 = arith.cmpi ne, %1, %c0_i32_0 : i32
    scf.if %2 {
      %cst_11 = arith.constant 0.000000e+00 : f32
      %c0_12 = arith.constant 0 : index
      %39 = memref.load %arg7[%c0_12] : memref<1xf32, #tpu.memory_space<smem>>
      memref.store %cst_11, %arg7[%c0_12] : memref<1xf32, #tpu.memory_space<smem>>
    } else {
    }
    %c0 = arith.constant 0 : index
    %c0_1 = arith.constant 0 : index
    %3 = vector.load %arg2[%c0, %c0_1] : memref<8x128xf32, #tpu.memory_space<vmem>>, vector<8x128xf32>
    %c0_2 = arith.constant 0 : index
    %c0_3 = arith.constant 0 : index
    %4 = vector.load %arg3[%c0_2, %c0_3] : memref<8x128xf32, #tpu.memory_space<vmem>>, vector<8x128xf32>
    %cst = arith.constant 0.000000e+00 : f32
    %5 = vector.broadcast %cst : f32 to vector<8x128xf32>
    %6 = arith.maximumf %3, %5 : vector<8x128xf32>
    %7 = arith.mulf %3, %4 : vector<8x128xf32>
    %8 = arith.subf %6, %7 : vector<8x128xf32>
    %9 = math.absf %3 : vector<8x128xf32>
    %cst_4 = arith.constant 0.000000e+00 : f32
    %10 = vector.broadcast %cst_4 : f32 to vector<8x128xf32>
    %11 = arith.subf %10, %9 : vector<8x128xf32>
    %12 = math.exp %11 : vector<8x128xf32>
    %13 = math.log1p %12 : vector<8x128xf32>
    %14 = arith.addf %8, %13 : vector<8x128xf32>
    %c1_i32 = arith.constant 1 : i32
    %15 = arith.muli %arg0, %c1_i32 : i32
    %16 = arith.addi %15, %arg1 : i32
    %c1024_i32 = arith.constant 1024 : i32
    %17 = arith.muli %16, %c1024_i32 : i32
    %18 = tpu.iota {dimensions = array<i32: 0>} : vector<8x128xi32>
    %19 = tpu.iota {dimensions = array<i32: 1>} : vector<8x128xi32>
    %c128_i32 = arith.constant 128 : i32
    %20 = vector.broadcast %c128_i32 : i32 to vector<8x128xi32>
    %21 = arith.muli %18, %20 : vector<8x128xi32>
    %22 = vector.broadcast %17 : i32 to vector<8x128xi32>
    %23 = arith.addi %22, %21 : vector<8x128xi32>
    %24 = arith.addi %23, %19 : vector<8x128xi32>
    %c160_i32 = arith.constant 160 : i32
    %25 = vector.broadcast %c160_i32 : i32 to vector<8x128xi32>
    %26 = arith.cmpi slt, %24, %25 : vector<8x128xi32>
    %cst_5 = arith.constant 0.000000e+00 : f32
    %27 = vector.broadcast %cst_5 : f32 to vector<8x128xf32>
    %28 = arith.select %26, %14, %27 : vector<8x128xi1>, vector<8x128xf32>
    %c0_6 = arith.constant 0 : index
    %29 = memref.load %arg7[%c0_6] : memref<1xf32, #tpu.memory_space<smem>>
    %30 = vector.shape_cast %28 : vector<8x128xf32> to vector<1x8x128xf32>
    %cst_7 = arith.constant dense<0.000000e+00> : vector<1xf32>
    %31 = vector.multi_reduction <add>, %30, %cst_7 [1, 2] : vector<1x8x128xf32> to vector<1xf32>
    %32 = vector.shape_cast %31 : vector<1xf32> to vector<1x1x1xf32>
    %33 = vector.extract %32[0, 0, 0] : f32 from vector<1x1x1xf32>
    %34 = arith.addf %29, %33 : f32
    %c0_8 = arith.constant 0 : index
    %35 = memref.load %arg7[%c0_8] : memref<1xf32, #tpu.memory_space<smem>>
    memref.store %34, %arg7[%c0_8] : memref<1xf32, #tpu.memory_space<smem>>
    %c0_i32_9 = arith.constant 0 : i32
    %36 = arith.cmpi eq, %arg1, %c0_i32_9 : i32
    %37 = arith.extui %36 : i1 to i32
    %c0_i32_10 = arith.constant 0 : i32
    %38 = arith.cmpi ne, %37, %c0_i32_10 : i32
    scf.if %38 {
      %c0_11 = arith.constant 0 : index
      %39 = memref.load %arg7[%c0_11] : memref<1xf32, #tpu.memory_space<smem>>
      %cst_12 = arith.constant 3.125000e-03 : f32
      %40 = arith.mulf %39, %cst_12 : f32
      %c0_13 = arith.constant 0 : index
      %c0_14 = arith.constant 0 : index
      %41 = vector.load %arg4[%c0_13, %c0_14] : memref<2x10xf32, #tpu.memory_space<vmem>>, vector<2x10xf32>
      %c0_15 = arith.constant 0 : index
      %c0_16 = arith.constant 0 : index
      %42 = vector.load %arg5[%c0_15, %c0_16] : memref<2x10xf32, #tpu.memory_space<vmem>>, vector<2x10xf32>
      %cst_17 = arith.constant 0.000000e+00 : f32
      %43 = vector.broadcast %cst_17 : f32 to vector<2x10xf32>
      %44 = arith.maximumf %41, %43 : vector<2x10xf32>
      %45 = arith.mulf %41, %42 : vector<2x10xf32>
      %46 = arith.subf %44, %45 : vector<2x10xf32>
      %47 = math.absf %41 : vector<2x10xf32>
      %cst_18 = arith.constant 0.000000e+00 : f32
      %48 = vector.broadcast %cst_18 : f32 to vector<2x10xf32>
      %49 = arith.subf %48, %47 : vector<2x10xf32>
      %50 = math.exp %49 : vector<2x10xf32>
      %51 = math.log1p %50 : vector<2x10xf32>
      %52 = arith.addf %46, %51 : vector<2x10xf32>
      %53 = vector.shape_cast %52 : vector<2x10xf32> to vector<1x2x10xf32>
      %cst_19 = arith.constant dense<0.000000e+00> : vector<1xf32>
      %54 = vector.multi_reduction <add>, %53, %cst_19 [1, 2] : vector<1x2x10xf32> to vector<1xf32>
      %55 = vector.shape_cast %54 : vector<1xf32> to vector<1x1x1xf32>
      %56 = vector.extract %55[0, 0, 0] : f32 from vector<1x1x1xf32>
      %cst_20 = arith.constant 2.500000e-02 : f32
      %57 = arith.mulf %cst_20, %56 : f32
      %c0_i32_21 = arith.constant 0 : i32
      %58 = arith.cmpi eq, %arg0, %c0_i32_21 : i32
      %cst_22 = arith.constant 0.000000e+00 : f32
      %59 = arith.select %58, %57, %cst_22 : f32
      %60 = arith.addf %40, %59 : f32
      %61 = vector.broadcast %60 : f32 to vector<1x1x128xf32>
      %c0_23 = arith.constant 0 : index
      %c0_24 = arith.constant 0 : index
      %c0_25 = arith.constant 0 : index
      %62 = vector.load %arg6[%c0_23, %c0_24, %c0_25] : memref<1x1x128xf32, #tpu.memory_space<vmem>>, vector<1x1x128xf32>
      tpu.vector_store %arg6[%c0_23, %c0_24, %c0_25], %61 {strides = array<i32>} : memref<1x1x128xf32, #tpu.memory_space<vmem>>, vector<1x1x128xf32>,
    } else {
    }
    return
  }
  func.func @transform_0(%arg0: i32, %arg1: i32) -> (i32, i32) {
    %c1_i32 = arith.constant 1 : i32
    %0 = arith.muli %arg0, %c1_i32 : i32
    %1 = arith.addi %0, %arg1 : i32
    %c0_i32 = arith.constant 0 : i32
    %c0_i32_0 = arith.constant 0 : i32
    return %1, %c0_i32 : i32, i32
  }
  func.func @transform_1(%arg0: i32, %arg1: i32) -> (i32, i32) {
    %c1_i32 = arith.constant 1 : i32
    %0 = arith.muli %arg0, %c1_i32 : i32
    %1 = arith.addi %0, %arg1 : i32
    %c0_i32 = arith.constant 0 : i32
    %c0_i32_0 = arith.constant 0 : i32
    return %1, %c0_i32 : i32, i32
  }
  func.func @transform_2(%arg0: i32, %arg1: i32) -> (i32, i32) {
    %c0_i32 = arith.constant 0 : i32
    %c0_i32_0 = arith.constant 0 : i32
    %c0_i32_1 = arith.constant 0 : i32
    return %c0_i32, %c0_i32_0 : i32, i32
  }
  func.func @transform_3(%arg0: i32, %arg1: i32) -> (i32, i32) {
    %c0_i32 = arith.constant 0 : i32
    %c0_i32_0 = arith.constant 0 : i32
    %c0_i32_1 = arith.constant 0 : i32
    return %c0_i32, %c0_i32_0 : i32, i32
  }
  func.func @transform_4(%arg0: i32, %arg1: i32) -> (i32, i32, i32) {
    %c0_i32 = arith.constant 0 : i32
    %c0_i32_0 = arith.constant 0 : i32
    %c0_i32_1 = arith.constant 0 : i32
    return %arg0, %c0_i32, %c0_i32_0 : i32, i32, i32
  }
}

</mosaic_0001>

<llo_original>
// kernel: tpu_custom_call.1
$region0: #{tpu_custom_call.1}
  #allocation0 [shape = 'u32[]', space=smem, size = 0x4, offset = 0x4, fixed_abs, tag = 'smem constant byte address 0x4 - core index']
  #allocation1 [shape = 'u32[144,128]{1,0:T(1,128)}', space=vmem, size = 0x12000, scoped, tag = 'internal scratch']
  #allocation2 [shape = 'f32[1]{0:T(128)}', space=smem, size = 0x200, scoped, tag = 'scratch operand']
  %s0 = inlined_call_operand.hbm [shape: f32[16,128], index: 0, kind: input, shape index: {}]
  %s1 = inlined_call_operand.hbm [shape: f32[16,128], index: 1, kind: input, shape index: {}]
  %s2 = inlined_call_operand.vmem [shape: f32[2,10], index: 2, kind: input, shape index: {}]
  %s3 = inlined_call_operand.vmem [shape: f32[2,10], index: 3, kind: input, shape index: {}]
  %s4 = inlined_call_operand.hbm [shape: f32[2,1,128], index: 4, kind: output, shape index: {}]
  %s5 = sld [smem:[#allocation0]]
  $region65: #{tpu_custom_call.1} parent=0
    _
  %s7 = ssub.s32 1, %s5
  %s8 = scalar_select 0, %s7, %s5
  $region1: #{tpu_custom_call.1} parent=0
    #allocation3 [shape = 'u8[8192]{0}', space=vmem, size = 0x2000, scoped, tag = 'input window, operand 0']
    #allocation4 [shape = 's32[2]{0}', space=sflag, size = 0x8, scoped, tag = 'scoped memory for tpu_custom_call.1']
    #allocation5 [shape = 's32[2]{0}', space=sflag, size = 0x8, scoped, tag = 'scoped memory for tpu_custom_call.1']
    #allocation6 [shape = 'u8[8192]{0}', space=vmem, size = 0x2000, scoped, tag = 'input window, operand 1']
    #allocation7 [shape = 's32[2]{0}', space=sflag, size = 0x8, scoped, tag = 'scoped memory for tpu_custom_call.1']
    #allocation8 [shape = 'u8[1024]{0}', space=vmem, size = 0x400, scoped, tag = 'output window, operand 0']
    %9 = vsyncpa [#allocation4], 0
    %s10 = scalar_lea.sflag [#allocation4], 1
    %11 = vsyncpa %s10, 0
    %12 = vsyncpa [#allocation7], 0
    %s13 = scalar_lea.sflag [#allocation7], 1
    %14 = vsyncpa %s13, 0
    %15 = vsyncpa [#allocation5], 0
    %s16 = scalar_lea.sflag [#allocation5], 1
    %17 = vsyncpa %s16, 0
    loop: start=0, step=1, limit=4
    $region2: #{tpu_custom_call.1} parent=1 // loop_pre_header
      _
    $region3: #{tpu_custom_call.1} parent=1 // loop_header
      %s19 = sphi 0, %s23
      %p20 = scmp.ge.s32.totalorder %s19, 4
      %s26 = sphi 0, %s38
      %s27 = sphi 0, %s34
      %s28 = sphi 0, %s26
      %s29 = sphi 0, %s27
      %s30 = sphi 0, %s28
      %s31 = sphi 0, %s29
      %s43 = sphi 0, %s45
      %s46 = sphi 0, %s43
      %s47 = sphi 0, %s46
      %s63 = sphi 0, %s47
      %s71 = sphi 0, %s73
      %s74 = sphi 0, %s71
      %s75 = sphi 0, %s74
      %s91 = sphi 0, %s75
      %s95 = sphi 0, %s95
      %s97 = sphi 0, %s95
      %s98 = sphi 0, %s97
      %s112 = sphi 0, %s98
      %s116 = sphi 0, %s116
      %s118 = sphi 0, %s116
      %s119 = sphi 0, %s118
      %s133 = sphi 0, %s119
      %s139 = sphi 0, %s141
      %s142 = sphi 0, %s139
      %s143 = sphi 0, %s142
      %s159 = sphi 0, %s143
    $region4: #{tpu_custom_call.1} parent=1 // loop_header_branch
      %22 = sbr.rel (%p20) target = $region8
    $region5: #{tpu_custom_call.1} parent=1 // loop_body
      %s24 = ssub.s32 %s19, 1
      %s25 = ssub.s32 %s19, 2
      %s32 = sadd.s32 1, %s27
      %p33 = scmp.ge.s32.totalorder %s32, 1
      %s34 = scalar_select %p33, 0, %s32
      %s35 = sadd.s32 1, %s26
      %s36 = scalar_select %p33, %s35, %s26
      %p37 = scmp.ge.s32.totalorder %s36, 2
      %s38 = scalar_select %p37, 0, %s36
      %s39 = sadd.s32 %s26, %s27
      %s40 = sadd.s32 %s38, %s34
      %s41 = ssub.s32 %s39, %s40
      %p42 = scmp.eq.s32.totalorder %s41, 0
      %s44 = sadd.s32 %s43, 1
      %s45 = scalar_select %p42, %s43, %s44
      %p48 = pneg %p42
      %p49 = scmp.eq.s32.totalorder %s19, 1
      %p50 = por %p48, %p49
      %p51 = scmp.ne.s32.totalorder %s43, %s46
      %p52 = scmp.eq.s32.totalorder %s19, 0
      %p53 = por %p51, %p52
      %p54 = scmp.ne.s32.totalorder %s43, %s46
      %p55 = scmp.eq.s32.totalorder %s24, 1
      %p56 = por %p54, %p55
      %p57 = scmp.ne.s32.totalorder %s46, %s47
      %p58 = scmp.eq.s32.totalorder %s24, 0
      %p59 = por %p57, %p58
      %p60 = scmp.ne.s32.totalorder %s46, %s47
      %p61 = scmp.eq.s32.totalorder %s25, 1
      %p62 = por %p60, %p61
      %p64 = scmp.ne.s32.totalorder %s47, %s63
      %p65 = scmp.eq.s32.totalorder %s25, 0
      %p66 = por %p64, %p65
      %s67 = sadd.s32 %s26, %s27
      %s68 = sadd.s32 %s38, %s34
      %s69 = ssub.s32 %s67, %s68
      %p70 = scmp.eq.s32.totalorder %s69, 0
      %s72 = sadd.s32 %s71, 1
      %s73 = scalar_select %p70, %s71, %s72
      %p76 = pneg %p70
      %p77 = scmp.eq.s32.totalorder %s19, 1
      %p78 = por %p76, %p77
      %p79 = scmp.ne.s32.totalorder %s71, %s74
      %p80 = scmp.eq.s32.totalorder %s19, 0
      %p81 = por %p79, %p80
      %p82 = scmp.ne.s32.totalorder %s71, %s74
      %p83 = scmp.eq.s32.totalorder %s24, 1
      %p84 = por %p82, %p83
      %p85 = scmp.ne.s32.totalorder %s74, %s75
      %p86 = scmp.eq.s32.totalorder %s24, 0
      %p87 = por %p85, %p86
      %p88 = scmp.ne.s32.totalorder %s74, %s75
      %p89 = scmp.eq.s32.totalorder %s25, 1
      %p90 = por %p88, %p89
      %p92 = scmp.ne.s32.totalorder %s75, %s91
      %p93 = scmp.eq.s32.totalorder %s25, 0
      %p94 = por %p92, %p93
      %s96 = sadd.s32 %s95, 1
      %p99 = scmp.eq.s32.totalorder %s19, 1
      %p100 = scmp.ne.s32.totalorder %s95, %s97
      %p101 = scmp.eq.s32.totalorder %s19, 0
      %p102 = por %p100, %p101
      %p103 = scmp.ne.s32.totalorder %s95, %s97
      %p104 = scmp.eq.s32.totalorder %s24, 1
      %p105 = por %p103, %p104
      %p106 = scmp.ne.s32.totalorder %s97, %s98
      %p107 = scmp.eq.s32.totalorder %s24, 0
      %p108 = por %p106, %p107
      %p109 = scmp.ne.s32.totalorder %s97, %s98
      %p110 = scmp.eq.s32.totalorder %s25, 1
      %p111 = por %p109, %p110
      %p113 = scmp.ne.s32.totalorder %s98, %s112
      %p114 = scmp.eq.s32.totalorder %s25, 0
      %p115 = por %p113, %p114
      %s117 = sadd.s32 %s116, 1
      %p120 = scmp.eq.s32.totalorder %s19, 1
      %p121 = scmp.ne.s32.totalorder %s116, %s118
      %p122 = scmp.eq.s32.totalorder %s19, 0
      %p123 = por %p121, %p122
      %p124 = scmp.ne.s32.totalorder %s116, %s118
      %p125 = scmp.eq.s32.totalorder %s24, 1
      %p126 = por %p124, %p125
      %p127 = scmp.ne.s32.totalorder %s118, %s119
      %p128 = scmp.eq.s32.totalorder %s24, 0
      %p129 = por %p127, %p128
      %p130 = scmp.ne.s32.totalorder %s118, %s119
      %p131 = scmp.eq.s32.totalorder %s25, 1
      %p132 = por %p130, %p131
      %p134 = scmp.ne.s32.totalorder %s119, %s133
      %p135 = scmp.eq.s32.totalorder %s25, 0
      %p136 = por %p134, %p135
      %s137 = ssub.s32 %s26, %s38
      %p138 = scmp.eq.s32.totalorder %s137, 0
      %s140 = sadd.s32 %s139, 1
      %s141 = scalar_select %p138, %s139, %s140
      %p144 = pneg %p138
      %p145 = scmp.eq.s32.totalorder %s19, 1
      %p146 = por %p144, %p145
      %p147 = scmp.ne.s32.totalorder %s139, %s142
      %p148 = scmp.eq.s32.totalorder %s19, 0
      %p149 = por %p147, %p148
      %p150 = scmp.ne.s32.totalorder %s139, %s142
      %p151 = scmp.eq.s32.totalorder %s24, 1
      %p152 = por %p150, %p151
      %p153 = scmp.ne.s32.totalorder %s142, %s143
      %p154 = scmp.eq.s32.totalorder %s24, 0
      %p155 = por %p153, %p154
      %p156 = scmp.ne.s32.totalorder %s142, %s143
      %p157 = scmp.eq.s32.totalorder %s25, 1
      %p158 = por %p156, %p157
      %p160 = scmp.ne.s32.totalorder %s143, %s159
      %p161 = scmp.eq.s32.totalorder %s25, 0
      %p162 = por %p160, %p161
      %p163 = scmp.le.s32.totalorder 1, %s19
      %p164 = scmp.lt.s32.totalorder %s19, 3
      %p165 = pnand %p163, %p164
      %p166 = pneg %p165
      // Predicated region
      $region9: #{tpu_custom_call.1} parent=5 // pred_check
        _
      $region10: #{tpu_custom_call.1} parent=5 // pred_check_branch
        %168 = sbr.rel (%p165) target = $region12
      $region11: #{tpu_custom_call.1} parent=5 // pred_region
        %s169 = ssub.s32 %s19, 1
        // Predicated region
        $region13: #{tpu_custom_call.1} parent=11 // pred_check
          %p170 = pneg %p108
        $region14: #{tpu_custom_call.1} parent=11 // pred_check_branch
          %172 = sbr.rel (%p170) target = $region16
        $region15: #{tpu_custom_call.1} parent=11 // pred_region
          _
        $region16: #{tpu_custom_call.1} parent=11 // pred_fallthru
          _
        // Predicated region
        $region17: #{tpu_custom_call.1} parent=11 // pred_check
          %p173 = pneg %p129
        $region18: #{tpu_custom_call.1} parent=11 // pred_check_branch
          %175 = sbr.rel (%p173) target = $region20
        $region19: #{tpu_custom_call.1} parent=11 // pred_region
          _
        $region20: #{tpu_custom_call.1} parent=11 // pred_fallthru
          _
      $region12: #{tpu_custom_call.1} parent=5 // pred_fallthru
        _
      %p176 = scmp.lt.s32.totalorder %s19, 2
      // Predicated region
      $region21: #{tpu_custom_call.1} parent=5 // pred_check
        %p177 = pneg %p176
      $region22: #{tpu_custom_call.1} parent=5 // pred_check_branch
        %179 = sbr.rel (%p177) target = $region24
      $region23: #{tpu_custom_call.1} parent=5 // pred_region
        // Predicated region
        $region25: #{tpu_custom_call.1} parent=23 // pred_check
          %p180 = pneg %p53
        $region26: #{tpu_custom_call.1} parent=23 // pred_check_branch
          %182 = sbr.rel (%p180) target = $region28
        $region27: #{tpu_custom_call.1} parent=23 // pred_region
          %s183 = sand.u32 %s43, 1
          %s184 = scalar_lea.sflag [#allocation4], %s183
          %s185 = sand.u32 %s43, 1
          %s186 = smul.addr %s185, 8
          %s187 = scalar_lea.vmem [#allocation3], %s186
          %s188 = sadd.s32 %s26, %s27
          %s190 = ssub.s32 128, 128
          %191 = vsyncadd %s184, %s190
          %s192 = smul.addr %s188, 128
          %s193 = scalar_lea.hbm %s0, %s192
          %s195 = sshll.u32 %s187, 4
          %s196 = int_to_ptr.vmem [resolvable:$true] %s195
          %198 = dma.hbm_to_vmem [thread:$0]  %s193, 128, %s196, %s184
        $region28: #{tpu_custom_call.1} parent=23 // pred_fallthru
          _
        // Predicated region
        $region29: #{tpu_custom_call.1} parent=23 // pred_check
          %p199 = pneg %p81
        $region30: #{tpu_custom_call.1} parent=23 // pred_check_branch
          %201 = sbr.rel (%p199) target = $region32
        $region31: #{tpu_custom_call.1} parent=23 // pred_region
          %s202 = sand.u32 %s71, 1
          %s203 = scalar_lea.sflag [#allocation7], %s202
          %s204 = sand.u32 %s71, 1
          %s205 = smul.addr %s204, 8
          %s206 = scalar_lea.vmem [#allocation6], %s205
          %s207 = sadd.s32 %s26, %s27
          %s209 = ssub.s32 128, 128
          %210 = vsyncadd %s203, %s209
          %s211 = smul.addr %s207, 128
          %s212 = scalar_lea.hbm %s1, %s211
          %s214 = sshll.u32 %s206, 4
          %s215 = int_to_ptr.vmem [resolvable:$true] %s214
          %217 = dma.hbm_to_vmem [thread:$0]  %s212, 128, %s215, %s203
        $region32: #{tpu_custom_call.1} parent=23 // pred_fallthru
          _
      $region24: #{tpu_custom_call.1} parent=5 // pred_fallthru
        _
      %p218 = scmp.le.s32.totalorder 1, %s19
      %p219 = scmp.lt.s32.totalorder %s19, 3
      %p220 = pnand %p218, %p219
      %p221 = pneg %p220
      // Predicated region
      $region33: #{tpu_custom_call.1} parent=5 // pred_check
        _
      $region34: #{tpu_custom_call.1} parent=5 // pred_check_branch
        %223 = sbr.rel (%p220) target = $region36
      $region35: #{tpu_custom_call.1} parent=5 // pred_region
        %s224 = ssub.s32 %s19, 1
        %s225 = sand.u32 %s46, 1
        %s226 = scalar_lea.sflag [#allocation4], %s225
        %s227 = sand.u32 %s46, 1
        %s228 = smul.addr %s227, 8
        %s229 = scalar_lea.vmem [#allocation3], %s228
        // Predicated region
        $region37: #{tpu_custom_call.1} parent=35 // pred_check
          %p230 = pneg %p59
        $region38: #{tpu_custom_call.1} parent=35 // pred_check_branch
          %232 = sbr.rel (%p230) target = $region40
        $region39: #{tpu_custom_call.1} parent=35 // pred_region
          %233 = dma.done %s226, 128
        $region40: #{tpu_custom_call.1} parent=35 // pred_fallthru
          _
        %s234 = sand.u32 %s74, 1
        %s235 = scalar_lea.sflag [#allocation7], %s234
        %s236 = sand.u32 %s74, 1
        %s237 = smul.addr %s236, 8
        %s238 = scalar_lea.vmem [#allocation6], %s237
        // Predicated region
        $region41: #{tpu_custom_call.1} parent=35 // pred_check
          %p239 = pneg %p87
        $region42: #{tpu_custom_call.1} parent=35 // pred_check_branch
          %241 = sbr.rel (%p239) target = $region44
        $region43: #{tpu_custom_call.1} parent=35 // pred_region
          %242 = dma.done %s235, 128
        $region44: #{tpu_custom_call.1} parent=35 // pred_fallthru
          _
        %s243 = sand.u32 %s46, 1
        %s244 = scalar_lea.sflag [#allocation4], %s243
        %s245 = sand.u32 %s46, 1
        %s246 = smul.addr %s245, 8
        %s247 = scalar_lea.vmem [#allocation3], %s246
        %p248 = pneg %p59
        %p249 = pneg %p56
        %s250 = sand.u32 %s74, 1
        %s251 = scalar_lea.sflag [#allocation7], %s250
        %s252 = sand.u32 %s74, 1
        %s253 = smul.addr %s252, 8
        %s254 = scalar_lea.vmem [#allocation6], %s253
        %p255 = pneg %p87
        %p256 = pneg %p84
        %p257 = pneg %p108
        %p258 = pneg %p105
        %p259 = pneg %p129
        %p260 = pneg %p126
        %p261 = pneg %p155
        %p262 = pneg %p152
        %s263 = sand.u32 %s142, 1
        %s264 = scalar_lea.sflag [#allocation5], %s263
        %s265 = sand.u32 %s142, 1
        %s266 = scalar_lea.vmem [#allocation8], %s265
        %s267 = sadd.s32 %s28, %s29
        %s268 = sadd.s32 %s28, %s29
        %p269 = scmp.eq.s32.totalorder %s29, 0
        // Predicated region
        $region45: #{tpu_custom_call.1} parent=35 // pred_check
          %p270 = pneg %p269
        $region46: #{tpu_custom_call.1} parent=35 // pred_check_branch
          %272 = sbr.rel (%p270) target = $region48
        $region47: #{tpu_custom_call.1} parent=35 // pred_region
          %s273 = scalar_lea.smem [#allocation2], 0
          %274 = sst [smem:[%s273]] 0.0
        $region48: #{tpu_custom_call.1} parent=35 // pred_fallthru
          _
        %v275 = vld [vmem:[%s229] sm:$0xff]
        %v276 = vld [vmem:[%s238] sm:$0xff]
        %v277 = vmax.f32 %v275, 0.0
        %v278 = vmul.f32 %v275, %v276
        %v279 = vsub.f32 %v277, %v278
        %v280 = vand.u32 2147483647, %v275
        %v281 = vsub.f32 0.0, %v280
        %v282 = vmul.f32 %v281, 1.442695
        %v283 = vpow.pop %v282
        %v284 = vadd.f32 %v283, 1.0
        %v285 = vlog2.pop %v284
        %v286 = vmul.f32 %v285, 0.6931472
        %v287 = vmul.f32 -0.5, %v283
        %v288 = vadd.f32 %v287, 1.0
        %v289 = vmul.f32 %v288, %v283
        %v290 = vand.u32 2147483647, %v283
        %vm291 = vcmp.lt.f32.partialorder %v290, 0.0004427343
        %v292 = vsel %vm291, %v289, %v286
        %v293 = vadd.f32 %v279, %v292
        %s294 = sadd.s32 %s28, %s29
        %s295 = smul.u32 %s294, 1024
        %v296 = vlaneseq
        %v297 = vshrl.u32 %v296, 7
        %v298 = vlaneseq
        %v299 = vand.u32 %v298, 127
        %v300 = vmul.u32 %v297, 128
        %v301 = vstv %s295
        %v302 = vadd.s32 %v301, %v300
        %v303 = vadd.s32 %v302, %v299
        %vm304 = vcmp.lt.s32.totalorder %v303, 160
        %v305 = vsel %vm304, %v293, 0.0
        %s306 = sld [smem:[#allocation2]]
        %307 = vadd.xlane.f32.xlu0 %v305
        %v308 = vpop.xlane.xlu0 %307
        %v309 = vrot.slane %v308, 4
        %v310 = vadd.f32 %v308, %v309
        %v311 = vrot.slane %v310, 2
        %v312 = vadd.f32 %v310, %v311
        %v313 = vrot.slane %v312, 1
        %v314 = vadd.f32 %v312, %v313
        %s315 = vtos %v314
        %s316 = sadd.f32 %s306, %s315
        %s317 = scalar_lea.smem [#allocation2], 0
        %318 = sst [smem:[%s317]] %s316
        // Predicated region
        $region49: #{tpu_custom_call.1} parent=35 // pred_check
          %p319 = pneg %p269
        $region50: #{tpu_custom_call.1} parent=35 // pred_check_branch
          %321 = sbr.rel (%p319) target = $region52
        $region51: #{tpu_custom_call.1} parent=35 // pred_region
          %s322 = sld [smem:[#allocation2]]
          %s323 = smul.f32 %s322, 0.003125
          %v324 = vld [vmem:[%s2] sm:$0x3]
          %v325 = vld [vmem:[%s3] sm:$0x3]
          %v326 = vmax.f32 %v324, 0.0
          %v327 = vmul.f32 %v324, %v325
          %v328 = vsub.f32 %v326, %v327
          %v329 = vand.u32 2147483647, %v324
          %v330 = vsub.f32 0.0, %v329
          %v331 = vmul.f32 %v330, 1.442695
          %v332 = vpow.pop %v331
          %v333 = vadd.f32 %v332, 1.0
          %v334 = vlog2.pop %v333
          %v335 = vmul.f32 %v334, 0.6931472
          %v336 = vmul.f32 -0.5, %v332
          %v337 = vadd.f32 %v336, 1.0
          %v338 = vmul.f32 %v337, %v332
          %v339 = vand.u32 2147483647, %v332
          %vm340 = vcmp.lt.f32.partialorder %v339, 0.0004427343
          %v341 = vsel %vm340, %v338, %v335
          %v342 = vadd.f32 %v328, %v341
          %vm343 = vcmask 74752
          %v344 = vsel %vm343, %v342, 0.0
          %345 = vadd.xlane.f32.xlu0 %v344
          %v346 = vpop.xlane.xlu0 %345
          %v347 = vrot.slane %v346, 4
          %v348 = vadd.f32 %v346, %v347
          %v349 = vrot.slane %v348, 2
          %v350 = vadd.f32 %v348, %v349
          %v351 = vrot.slane %v350, 1
          %v352 = vadd.f32 %v350, %v351
          %s353 = vtos %v352
          %s354 = smul.f32 %s353, 0.025
          %p355 = scmp.eq.s32.totalorder %s28, 0
          %s356 = scalar_select %p355, %s354, 0.0
          %s357 = sadd.f32 %s323, %s356
          %v358 = vstv %s357
          %359 = vst [vmem:[%s266] sm:$0x1] %v358
        $region52: #{tpu_custom_call.1} parent=35 // pred_fallthru
          _
        %s360 = sand.u32 %s142, 1
        %s361 = scalar_lea.sflag [#allocation5], %s360
        %s362 = sand.u32 %s142, 1
        %s363 = scalar_lea.vmem [#allocation8], %s362
        // Predicated region
        $region53: #{tpu_custom_call.1} parent=35 // pred_check
          %p364 = pneg %p152
        $region54: #{tpu_custom_call.1} parent=35 // pred_check_branch
          %366 = sbr.rel (%p364) target = $region56
        $region55: #{tpu_custom_call.1} parent=35 // pred_region
          %s368 = ssub.s32 16, 16
          %369 = vsyncadd %s361, %s368
          %s370 = smul.addr %s28, 16
          %s371 = scalar_lea.hbm %s4, %s370
          %s373 = sshll.u32 %s363, 4
          %s374 = int_to_ptr.vmem [resolvable:$true] %s373
          %376 = dma.vmem_to_hbm [thread:$0]  %s374, 16, %s371, %s361
        $region56: #{tpu_custom_call.1} parent=35 // pred_fallthru
          _
      $region36: #{tpu_custom_call.1} parent=5 // pred_fallthru
        _
      %p377 = scmp.le.s32.totalorder 2, %s19
      // Predicated region
      $region57: #{tpu_custom_call.1} parent=5 // pred_check
        %p378 = pneg %p377
      $region58: #{tpu_custom_call.1} parent=5 // pred_check_branch
        %380 = sbr.rel (%p378) target = $region60
      $region59: #{tpu_custom_call.1} parent=5 // pred_region
        %s381 = ssub.s32 %s19, 2
        // Predicated region
        $region61: #{tpu_custom_call.1} parent=59 // pred_check
          %p382 = pneg %p158
        $region62: #{tpu_custom_call.1} parent=59 // pred_check_branch
          %384 = sbr.rel (%p382) target = $region64
        $region63: #{tpu_custom_call.1} parent=59 // pred_region
          %s385 = sand.u32 %s143, 1
          %s386 = scalar_lea.sflag [#allocation5], %s385
          %s387 = sand.u32 %s143, 1
          %s388 = scalar_lea.vmem [#allocation8], %s387
          %389 = dma.done %s386, 16
        $region64: #{tpu_custom_call.1} parent=59 // pred_fallthru
          _
      $region60: #{tpu_custom_call.1} parent=5 // pred_fallthru
        _
    $region6: #{tpu_custom_call.1} parent=1 // loop_footer
      %s23 = sadd.s32 1, %s19
    $region7: #{tpu_custom_call.1} parent=1 // loop_footer_branch
      %18 = sbr.rel target = $region3
    $region8: #{tpu_custom_call.1} parent=1 // loop_exit
      _
    %390 = vsyncpa [#allocation4], 1
    %s391 = scalar_lea.sflag [#allocation4], 1
    %392 = vsyncpa %s391, 1
    %393 = vsyncpa [#allocation7], 1
    %s394 = scalar_lea.sflag [#allocation7], 1
    %395 = vsyncpa %s394, 1
    %396 = vsyncpa [#allocation5], 1
    %s397 = scalar_lea.sflag [#allocation5], 1
    %398 = vsyncpa %s397, 1

</llo_original>
